<compile_context>
chip_gen: v7x
topology: tpu7x:2x2x1
jax: 0.10.0
libtpu: 0.0.40
codegen_flags: <defaults>
</compile_context>

<pallas_src>
import math
import functools

import jax
import jax.numpy as jnp
from jax.experimental import pallas as pl
from jax.experimental.pallas import tpu as pltpu


# --------------------------------------------------------------------------- #
# Kernel                                                                      #
# --------------------------------------------------------------------------- #
def _sdpa_kernel(q_ref, k_ref, v_ref, mask_ref, ctx_ref, attn_ref, *, scale, precise):
    # Blocks: q (G, TQ, d_k), k (G, Lk, d_k), v (G, Lk, d_v),
    #         mask (Gm, TQm, Lkm) int8 (broadcasts against (G, TQ, Lk)),
    #         ctx (G, TQ, d_v), attn (G, TQ, Lk).
    q = q_ref[...]
    k = k_ref[...]
    v = v_ref[...]
    masked = mask_ref[...] != 0  # int8 compared directly; no int32 widen.

    # Feed the MXU bf16 when inputs are f32 (3-8x matmul throughput on v6e/v7x);
    # accumulation stays f32 via preferred_element_type.
    if (not precise) and q.dtype == jnp.float32:
        qm = q.astype(jnp.bfloat16)
        km = k.astype(jnp.bfloat16)
    else:
        qm, km = q, k

    # scores = Q @ K^T / sqrt(d_k): contraction expressed directly (no K^T copy).
    scores = jnp.einsum("gqd,gkd->gqk", qm, km, preferred_element_type=jnp.float32)
    scores = scores * jnp.float32(scale)

    # masked_fill_(attn_mask, -1e9); mask block broadcasts over heads / rows.
    scores = jnp.where(masked, jnp.float32(-1e9), scores)

    # Numerically stable softmax over the last dim (f32 math on the VPU/EUP).
    m = jnp.max(scores, axis=-1, keepdims=True)
    e = jnp.exp(scores - m)
    denom = jnp.sum(e, axis=-1, keepdims=True)
    probs = e * pl.reciprocal(denom, approx=not precise)

    # context = attn @ V (bf16-fed MXU in the fast path, f32 accumulation).
    if precise:
        pv_dtype = v.dtype
    else:
        pv_dtype = jnp.bfloat16 if v.dtype == jnp.float32 else v.dtype
    ctx = jnp.einsum(
        "gqk,gkv->gqv",
        probs.astype(pv_dtype),
        v.astype(pv_dtype),
        preferred_element_type=jnp.float32,
    )

    ctx_ref[...] = ctx.astype(ctx_ref.dtype)
    attn_ref[...] = probs.astype(attn_ref.dtype)


# --------------------------------------------------------------------------- #
# Block-size heuristics                                                       #
# --------------------------------------------------------------------------- #
def _vmem_budgets():
    """(group_budget_bytes, vmem_limit_bytes), generation-aware."""
    try:
        cap = pltpu.get_tpu_info().vmem_capacity_bytes
    except Exception:
        cap = None
    if cap is not None and cap >= (96 << 20):      # v5e / v6e: 128 MiB VMEM
        return 20 << 20, 64 << 20
    return 12 << 20, 32 << 20                      # v7x (64 MiB) / unknown


def _pick_q_tile(Lq, Lk):
    """Tile Lq only when single-head f32 softmax temporaries would be large."""
    if Lq * Lk * 4 <= (2 << 20):                   # <= 2 MiB: no tiling needed
        return Lq
    # Prefer MXU-aligned tiles; 32 is the int8-mask sublane minimum.
    for tq in (512, 256, 128, 64, 32):
        if tq < Lq and Lq % tq == 0:
            return tq
    for tq in range(512, 31, -1):                  # any divisor >= 32
        if Lq % tq == 0:
            return tq
    return Lq


def _pick_group_size(BH, divisor_base, tq, Lk, d_k, d_v, itemsize, attn_itemsize,
                     budget_bytes):
    """Heads processed per grid step; G must divide `divisor_base`."""
    per_head = (tq * d_k + Lk * d_k + Lk * d_v) * itemsize        # q, k, v in
    per_head += tq * d_v * itemsize + tq * Lk * attn_itemsize     # ctx, attn out
    per_head += tq * Lk * 1                                       # mask (int8)
    per_head *= 2                                                 # double buffering
    per_head += 4 * tq * Lk * 4                                   # live f32 temps
    g_cap = max(1, budget_bytes // max(per_head, 1))
    divisors = [g for g in range(1, divisor_base + 1)
                if divisor_base % g == 0 and g <= g_cap]
    # Prefer leaving >= 2 grid steps along the head axis (megacore / v7x 2 TCs).
    preferred = [g for g in divisors if BH // g >= 2]
    return max(preferred) if preferred else max(divisors)


# --------------------------------------------------------------------------- #
# Mask handling (broadcast-aware)                                             #
# --------------------------------------------------------------------------- #
def _mask_mode(mb, mh, B, H):
    if mh == H and mb == B:
        return "full"
    if mb == 1 and mh == 1:
        return "shared"
    if mh == 1:            # mb == B
        return "per_batch"
    return "per_head"      # mb == 1, mh == H


def _make_mask_spec(mode, mask3, G, H, TQ, Lq):
    _, mq, mk = mask3.shape
    tqm = TQ if mq == Lq else 1
    hb = G if mode in ("full", "per_head") else 1
    q_idx = (lambda j: j) if mq == Lq else (lambda j: 0)
    if mode == "full":
        imap = lambda i, j: (i, q_idx(j), 0)
    elif mode == "per_batch":
        imap = lambda i, j: ((i * G) // H, q_idx(j), 0)
    elif mode == "per_head":
        imap = lambda i, j: (i % (H // G), q_idx(j), 0)
    else:  # shared
        imap = lambda i, j: (0, q_idx(j), 0)
    return pl.BlockSpec((hb, tqm, mk), imap)


# --------------------------------------------------------------------------- #
# Wrapper                                                                     #
# --------------------------------------------------------------------------- #
def scaled_dot_product_attention(Q, K, V, attn_mask, *, precise=False, attn_dtype=None):
    """Q:[B,H,Lq,dk], K:[B,H,Lk,dk], V:[B,H,Lk,dv], attn_mask broadcastable to
    [B,H,Lq,Lk] (True = masked).  Returns (context, attn) like the torch module.

    precise=False (default): bf16-fed MXU + approx reciprocal (fast path).
    precise=True:            exact f32 matmul feed + exact reciprocal.
    attn_dtype:              dtype of the returned attention matrix (default:
                             Q.dtype; pass jnp.bfloat16 to halve attn writeback).
    """
    B, H, Lq, d_k = Q.shape
    Lk = K.shape[2]
    d_v = V.shape[3]
    BH = B * H
    out_dtype = Q.dtype
    attn_dtype = out_dtype if attn_dtype is None else attn_dtype
    itemsize = jnp.dtype(Q.dtype).itemsize

    # ---- Normalize mask to a compact 3-D array (no H-fold expansion). ----
    if attn_mask.ndim < 4:
        attn_mask = attn_mask.reshape((1,) * (4 - attn_mask.ndim) + attn_mask.shape)
    mb, mh, mq, mk = attn_mask.shape
    if mb not in (1, B) or mh not in (1, H) or mq not in (1, Lq) or mk not in (1, Lk):
        raise ValueError(
            f"attn_mask shape {attn_mask.shape} not broadcastable to {(B, H, Lq, Lk)}")
    mode = _mask_mode(mb, mh, B, H)
    lead = {"full": BH, "per_batch": B, "per_head": H, "shared": 1}[mode]
    mask3 = attn_mask.astype(jnp.int8).reshape(lead, mq, mk)

    # ---- Tiling / grouping. ----
    TQ = _pick_q_tile(Lq, Lk)
    group_budget, vmem_limit = _vmem_budgets()
    # When the mask broadcasts over heads (or over batch), a head group must not
    # cross a batch boundary -> G must divide H.
    divisor_base = H if mode in ("per_batch", "per_head") else BH
    G = _pick_group_size(BH, divisor_base, TQ, Lk, d_k, d_v, itemsize,
                         jnp.dtype(attn_dtype).itemsize, group_budget)
    n_head_blocks = BH // G
    n_q_blocks = Lq // TQ

    q = Q.reshape(BH, Lq, d_k)
    k = K.reshape(BH, Lk, d_k)
    v = V.reshape(BH, Lk, d_v)

    kernel = functools.partial(
        _sdpa_kernel, scale=float(1.0 / math.sqrt(d_k)), precise=precise)

    ctx, attn = pl.pallas_call(
        kernel,
        out_shape=(
            jax.ShapeDtypeStruct((BH, Lq, d_v), out_dtype),
            jax.ShapeDtypeStruct((BH, Lq, Lk), attn_dtype),
        ),
        grid_spec=pltpu.PrefetchScalarGridSpec(
            num_scalar_prefetch=0,
            grid=(n_head_blocks, n_q_blocks),
            in_specs=[
                pl.BlockSpec((G, TQ, d_k), lambda i, j: (i, j, 0)),
                pl.BlockSpec((G, Lk, d_k), lambda i, j: (i, 0, 0)),
                pl.BlockSpec((G, Lk, d_v), lambda i, j: (i, 0, 0)),
                _make_mask_spec(mode, mask3, G, H, TQ, Lq),
            ],
            out_specs=[
                pl.BlockSpec((G, TQ, d_v), lambda i, j: (i, j, 0)),
                pl.BlockSpec((G, TQ, Lk), lambda i, j: (i, j, 0)),
            ],
        ),
        compiler_params=pltpu.CompilerParams(
            dimension_semantics=("parallel", "parallel"),
            vmem_limit_bytes=vmem_limit,
        ),
    )(q, k, v, mask3)

    return ctx.reshape(B, H, Lq, d_v), attn.reshape(B, H, Lq, Lk)


# --------------------------------------------------------------------------- #
# Reference + self-test                                                       #
# --------------------------------------------------------------------------- #
def _reference(Q, K, V, attn_mask, d_k):
    scores = jnp.einsum("bhqd,bhkd->bhqk", Q, K) / jnp.sqrt(jnp.float32(d_k))
    scores = jnp.where(attn_mask, jnp.float32(-1e9), scores)
    attn = jax.nn.softmax(scores, axis=-1)
    context = jnp.einsum("bhqk,bhkv->bhqv", attn, V)
    return context, attn


if __name__ == "__main__":
    # Small shapes consistent with the module's forward.
    B, H, Lq, Lk, d_k, d_v = 2, 2, 8, 8, 16, 16

    key = jax.random.PRNGKey(0)
    kq, kk, kv, km, kb = jax.random.split(key, 5)
    Q = jax.random.normal(kq, (B, H, Lq, d_k), dtype=jnp.float32)
    K = jax.random.normal(kk, (B, H, Lk, d_k), dtype=jnp.float32)
    V = jax.random.normal(kv, (B, H, Lk, d_v), dtype=jnp.float32)
    # Boolean attention mask (True = masked position), like the torch module.
    attn_mask = jax.random.bernoulli(km, p=0.2, shape=(B, H, Lq, Lk))

    ctx_ref, attn_ref = _reference(Q, K, V, attn_mask, d_k)

    # Precise path: exact f32 MXU feed + exact reciprocal.
    ctx_p, attn_p = scaled_dot_product_attention(Q, K, V, attn_mask, precise=True)
    jax.block_until_ready((ctx_p, attn_p))
    assert jnp.allclose(ctx_p, ctx_ref, atol=1e-5, rtol=1e-5)
    assert jnp.allclose(attn_p, attn_ref, atol=1e-5, rtol=1e-5)

    # Fast path: bf16-fed MXU, approx reciprocal, bf16 attn writeback.
    ctx_f, attn_f = scaled_dot_product_attention(
        Q, K, V, attn_mask, precise=False, attn_dtype=jnp.bfloat16)
    jax.block_until_ready((ctx_f, attn_f))
    assert jnp.allclose(ctx_f, ctx_ref, atol=5e-2, rtol=5e-2)
    assert jnp.allclose(attn_f.astype(jnp.float32), attn_ref, atol=5e-2, rtol=5e-2)

    # Broadcast mask ([B, 1, 1, Lk]) routed via index_map (no H-fold expansion).
    bmask = jax.random.bernoulli(kb, p=0.2, shape=(B, 1, 1, Lk))
    ctx_b, attn_b = scaled_dot_product_attention(Q, K, V, bmask, precise=True)
    jax.block_until_ready((ctx_b, attn_b))
    ctx_bref, attn_bref = _reference(Q, K, V, bmask, d_k)
    assert jnp.allclose(ctx_b, ctx_bref, atol=1e-5, rtol=1e-5)
    assert jnp.allclose(attn_b, attn_bref, atol=1e-5, rtol=1e-5)

    print("KERNEL_OK")
</pallas_src>

<mosaic_0001>
module attributes {stable_mosaic.version = 11 : i64} {
  func.func @_sdpa_kernel(%arg0: i32, %arg1: i32, %arg2: memref<2x8x16xf32, #tpu.memory_space<vmem>>, %arg3: memref<2x8x16xf32, #tpu.memory_space<vmem>>, %arg4: memref<2x8x16xf32, #tpu.memory_space<vmem>>, %arg5: memref<2x8x8xi8, #tpu.memory_space<vmem>>, %arg6: memref<2x8x16xf32, #tpu.memory_space<vmem>>, %arg7: memref<2x8x8xf32, #tpu.memory_space<vmem>>) attributes {dimension_semantics = [#tpu.dimension_semantics<parallel>, #tpu.dimension_semantics<parallel>], iteration_bounds = array<i64: 2, 1>, scalar_prefetch = 0 : i64, scratch_operands = 0 : i64, tpu.core_type = #tpu.core_type<tc>, window_params = [{transform_indices = @transform_0, window_bounds = array<i64: 2, 8, 16>}, {transform_indices = @transform_1, window_bounds = array<i64: 2, 8, 16>}, {transform_indices = @transform_2, window_bounds = array<i64: 2, 8, 16>}, {transform_indices = @transform_3, window_bounds = array<i64: 2, 8, 8>}, {transform_indices = @transform_4, window_bounds = array<i64: 2, 8, 16>}, {transform_indices = @transform_5, window_bounds = array<i64: 2, 8, 8>}]} {
    %c0 = arith.constant 0 : index
    %c0_0 = arith.constant 0 : index
    %c0_1 = arith.constant 0 : index
    %0 = vector.load %arg2[%c0, %c0_0, %c0_1] : memref<2x8x16xf32, #tpu.memory_space<vmem>>, vector<2x8x16xf32>
    %c0_2 = arith.constant 0 : index
    %c0_3 = arith.constant 0 : index
    %c0_4 = arith.constant 0 : index
    %1 = vector.load %arg3[%c0_2, %c0_3, %c0_4] : memref<2x8x16xf32, #tpu.memory_space<vmem>>, vector<2x8x16xf32>
    %c0_5 = arith.constant 0 : index
    %c0_6 = arith.constant 0 : index
    %c0_7 = arith.constant 0 : index
    %2 = vector.load %arg4[%c0_5, %c0_6, %c0_7] : memref<2x8x16xf32, #tpu.memory_space<vmem>>, vector<2x8x16xf32>
    %c0_8 = arith.constant 0 : index
    %c0_9 = arith.constant 0 : index
    %c0_10 = arith.constant 0 : index
    %3 = vector.load %arg5[%c0_8, %c0_9, %c0_10] : memref<2x8x8xi8, #tpu.memory_space<vmem>>, vector<2x8x8xi8>
    %c0_i8 = arith.constant 0 : i8
    %4 = vector.broadcast %c0_i8 : i8 to vector<2x8x8xi8>
    %5 = arith.cmpi ne, %3, %4 : vector<2x8x8xi8>
    "tpu.trace_start"() <{level = 10 : i32, message = "gqd,gkd->gqk"}> : () -> ()
    %cst = arith.constant dense<0.000000e+00> : vector<2x8x8xf32>
    %6 = tpu.matmul %0, %1, %cst {dimension_numbers = #tpu.dot_dimension_numbers<[2], [2], [1], [1], [0, 0, 0, 1, 1, 1], [0], [0]>} : vector<2x8x16xf32>, vector<2x8x16xf32>, vector<2x8x8xf32> -> vector<2x8x8xf32>
    "tpu.trace_stop"() : () -> ()
    %cst_11 = arith.constant 2.500000e-01 : f32
    %7 = vector.broadcast %cst_11 : f32 to vector<2x8x8xf32>
    %8 = arith.mulf %6, %7 : vector<2x8x8xf32>
    %cst_12 = arith.constant -1.000000e+09 : f32
    %9 = vector.broadcast %cst_12 : f32 to vector<2x8x8xf32>
    %10 = arith.select %5, %9, %8 : vector<2x8x8xi1>, vector<2x8x8xf32>
    %cst_13 = arith.constant dense<0xFF800000> : vector<2x8xf32>
    %11 = vector.multi_reduction <maximumf>, %10, %cst_13 [2] : vector<2x8x8xf32> to vector<2x8xf32>
    %12 = vector.shape_cast %11 : vector<2x8xf32> to vector<2x8x1xf32>
    %13 = vector.broadcast %12 : vector<2x8x1xf32> to vector<2x8x8xf32>
    %14 = arith.subf %10, %13 : vector<2x8x8xf32>
    %15 = math.exp %14 : vector<2x8x8xf32>
    %cst_14 = arith.constant dense<0.000000e+00> : vector<2x8xf32>
    %16 = vector.multi_reduction <add>, %15, %cst_14 [2] : vector<2x8x8xf32> to vector<2x8xf32>
    %17 = vector.shape_cast %16 : vector<2x8xf32> to vector<2x8x1xf32>
    %18 = tpu.reciprocal %17 : vector<2x8x1xf32> -> vector<2x8x1xf32>
    %19 = vector.broadcast %18 : vector<2x8x1xf32> to vector<2x8x8xf32>
    %20 = arith.mulf %15, %19 : vector<2x8x8xf32>
    "tpu.trace_start"() <{level = 10 : i32, message = "gqk,gkv->gqv"}> : () -> ()
    %cst_15 = arith.constant dense<0.000000e+00> : vector<2x8x16xf32>
    %21 = tpu.matmul %20, %2, %cst_15 {dimension_numbers = #tpu.dot_dimension_numbers<[2], [1], [1], [2], [0, 0, 0, 1, 1, 2], [0], [0]>} : vector<2x8x8xf32>, vector<2x8x16xf32>, vector<2x8x16xf32> -> vector<2x8x16xf32>
    "tpu.trace_stop"() : () -> ()
    %c0_16 = arith.constant 0 : index
    %c0_17 = arith.constant 0 : index
    %c0_18 = arith.constant 0 : index
    %22 = vector.load %arg6[%c0_16, %c0_17, %c0_18] : memref<2x8x16xf32, #tpu.memory_space<vmem>>, vector<2x8x16xf32>
    tpu.vector_store %arg6[%c0_16, %c0_17, %c0_18], %21 {strides = array<i32>} : memref<2x8x16xf32, #tpu.memory_space<vmem>>, vector<2x8x16xf32>,
    %c0_19 = arith.constant 0 : index
    %c0_20 = arith.constant 0 : index
    %c0_21 = arith.constant 0 : index
    %23 = vector.load %arg7[%c0_19, %c0_20, %c0_21] : memref<2x8x8xf32, #tpu.memory_space<vmem>>, vector<2x8x8xf32>
    tpu.vector_store %arg7[%c0_19, %c0_20, %c0_21], %20 {strides = array<i32>} : memref<2x8x8xf32, #tpu.memory_space<vmem>>, vector<2x8x8xf32>,
    return
  }
  func.func @transform_0(%arg0: i32, %arg1: i32) -> (i32, i32, i32) {
    %c0_i32 = arith.constant 0 : i32
    %c0_i32_0 = arith.constant 0 : i32
    return %arg0, %arg1, %c0_i32 : i32, i32, i32
  }
  func.func @transform_1(%arg0: i32, %arg1: i32) -> (i32, i32, i32) {
    %c0_i32 = arith.constant 0 : i32
    %c0_i32_0 = arith.constant 0 : i32
    %c0_i32_1 = arith.constant 0 : i32
    return %arg0, %c0_i32, %c0_i32_0 : i32, i32, i32
  }
  func.func @transform_2(%arg0: i32, %arg1: i32) -> (i32, i32, i32) {
    %c0_i32 = arith.constant 0 : i32
    %c0_i32_0 = arith.constant 0 : i32
    %c0_i32_1 = arith.constant 0 : i32
    return %arg0, %c0_i32, %c0_i32_0 : i32, i32, i32
  }
  func.func @transform_3(%arg0: i32, %arg1: i32) -> (i32, i32, i32) {
    %c0_i32 = arith.constant 0 : i32
    %c0_i32_0 = arith.constant 0 : i32
    return %arg0, %arg1, %c0_i32 : i32, i32, i32
  }
  func.func @transform_4(%arg0: i32, %arg1: i32) -> (i32, i32, i32) {
    %c0_i32 = arith.constant 0 : i32
    %c0_i32_0 = arith.constant 0 : i32
    return %arg0, %arg1, %c0_i32 : i32, i32, i32
  }
  func.func @transform_5(%arg0: i32, %arg1: i32) -> (i32, i32, i32) {
    %c0_i32 = arith.constant 0 : i32
    %c0_i32_0 = arith.constant 0 : i32
    return %arg0, %arg1, %c0_i32 : i32, i32, i32
  }
}

</mosaic_0001>

<llo_original>
// kernel: tpu_custom_call.1
$region0: #{tpu_custom_call.1}
  #allocation0 [shape = 'u32[]', space=smem, size = 0x4, offset = 0x4, fixed_abs, tag = 'smem constant byte address 0x4 - core index']
  #allocation1 [shape = 'u32[144,128]{1,0:T(1,128)}', space=vmem, size = 0x12000, scoped, tag = 'internal scratch']
  %s0 = inlined_call_operand.hbm [shape: f32[4,8,16], index: 0, kind: input, shape index: {}]
  %s1 = inlined_call_operand.hbm [shape: f32[4,8,16], index: 1, kind: input, shape index: {}]
  %s2 = inlined_call_operand.hbm [shape: f32[4,8,16], index: 2, kind: input, shape index: {}]
  %s3 = inlined_call_operand.vmem [shape: s8[4,8,8], index: 3, kind: input, shape index: {}]
  %s4 = inlined_call_operand.hbm [shape: f32[4,8,16], index: 4, kind: output, shape index: {0}]
  %s5 = inlined_call_operand.hbm [shape: f32[4,8,8], index: 5, kind: output, shape index: {1}]
  %6 = xla_tuple %s4, %s5
  %s7 = sld [smem:[#allocation0]]
  $region69: #{tpu_custom_call.1} parent=0
    _
  %s9 = ssub.s32 1, %s7
  %s10 = scalar_select 0, %s9, %s7
  $region1: #{tpu_custom_call.1} parent=0
    #allocation2 [shape = 'u8[16384]{0}', space=vmem, size = 0x4000, scoped, tag = 'input window, operand 0']
    #allocation3 [shape = 's32[2]{0}', space=sflag, size = 0x8, scoped, tag = 'scoped memory for tpu_custom_call.1']
    #allocation4 [shape = 's32[2]{0}', space=sflag, size = 0x8, scoped, tag = 'scoped memory for tpu_custom_call.1']
    #allocation5 [shape = 'u8[16384]{0}', space=vmem, size = 0x4000, scoped, tag = 'input window, operand 1']
    #allocation6 [shape = 's32[2]{0}', space=sflag, size = 0x8, scoped, tag = 'scoped memory for tpu_custom_call.1']
    #allocation7 [shape = 'u8[16384]{0}', space=vmem, size = 0x4000, scoped, tag = 'input window, operand 2']
    #allocation8 [shape = 'u8[16384]{0}', space=vmem, size = 0x4000, scoped, tag = 'output window, operand 0']
    #allocation9 [shape = 'u8[16384]{0}', space=vmem, size = 0x4000, scoped, tag = 'output window, operand 1']
    #allocation10 [shape = 's32[2]{0}', space=sflag, size = 0x8, scoped, tag = 'scoped memory for tpu_custom_call.1']
    %11 = vsyncpa [#allocation3], 0
    %s12 = scalar_lea.sflag [#allocation3], 1
    %13 = vsyncpa %s12, 0
    %14 = vsyncpa [#allocation6], 0
    %s15 = scalar_lea.sflag [#allocation6], 1
    %16 = vsyncpa %s15, 0
    %17 = vsyncpa [#allocation4], 0
    %s18 = scalar_lea.sflag [#allocation4], 1
    %19 = vsyncpa %s18, 0
    %20 = vsyncpa [#allocation10], 0
    %s21 = scalar_lea.sflag [#allocation10], 1
    %22 = vsyncpa %s21, 0
    loop: start=0, step=1, limit=4
    $region2: #{tpu_custom_call.1} parent=1 // loop_pre_header
      _
    $region3: #{tpu_custom_call.1} parent=1 // loop_header
      %s24 = sphi 0, %s28
      %p25 = scmp.ge.s32.totalorder %s24, 4
      %s31 = sphi 0, %s43
      %s32 = sphi 0, %s39
      %s33 = sphi 0, %s31
      %s34 = sphi 0, %s32
      %s35 = sphi 0, %s33
      %s36 = sphi 0, %s34
      %s48 = sphi 0, %s50
      %s51 = sphi 0, %s48
      %s52 = sphi 0, %s51
      %s68 = sphi 0, %s52
      %s74 = sphi 0, %s76
      %s77 = sphi 0, %s74
      %s78 = sphi 0, %s77
      %s94 = sphi 0, %s78
      %s100 = sphi 0, %s102
      %s103 = sphi 0, %s100
      %s104 = sphi 0, %s103
      %s120 = sphi 0, %s104
      %s128 = sphi 0, %s130
      %s131 = sphi 0, %s128
      %s132 = sphi 0, %s131
      %s148 = sphi 0, %s132
      %s156 = sphi 0, %s158
      %s159 = sphi 0, %s156
      %s160 = sphi 0, %s159
      %s176 = sphi 0, %s160
      %s184 = sphi 0, %s186
      %s187 = sphi 0, %s184
      %s188 = sphi 0, %s187
      %s204 = sphi 0, %s188
    $region4: #{tpu_custom_call.1} parent=1 // loop_header_branch
      %27 = sbr.rel (%p25) target = $region8
    $region5: #{tpu_custom_call.1} parent=1 // loop_body
      %s29 = ssub.s32 %s24, 1
      %s30 = ssub.s32 %s24, 2
      %s37 = sadd.s32 1, %s32
      %p38 = scmp.ge.s32.totalorder %s37, 1
      %s39 = scalar_select %p38, 0, %s37
      %s40 = sadd.s32 1, %s31
      %s41 = scalar_select %p38, %s40, %s31
      %p42 = scmp.ge.s32.totalorder %s41, 2
      %s43 = scalar_select %p42, 0, %s41
      %s44 = ssub.s32 %s31, %s43
      %s45 = ssub.s32 %s32, %s39
      %s46 = sor.u32 %s44, %s45
      %p47 = scmp.eq.s32.totalorder %s46, 0
      %s49 = sadd.s32 %s48, 1
      %s50 = scalar_select %p47, %s48, %s49
      %p53 = pneg %p47
      %p54 = scmp.eq.s32.totalorder %s24, 1
      %p55 = por %p53, %p54
      %p56 = scmp.ne.s32.totalorder %s48, %s51
      %p57 = scmp.eq.s32.totalorder %s24, 0
      %p58 = por %p56, %p57
      %p59 = scmp.ne.s32.totalorder %s48, %s51
      %p60 = scmp.eq.s32.totalorder %s29, 1
      %p61 = por %p59, %p60
      %p62 = scmp.ne.s32.totalorder %s51, %s52
      %p63 = scmp.eq.s32.totalorder %s29, 0
      %p64 = por %p62, %p63
      %p65 = scmp.ne.s32.totalorder %s51, %s52
      %p66 = scmp.eq.s32.totalorder %s30, 1
      %p67 = por %p65, %p66
      %p69 = scmp.ne.s32.totalorder %s52, %s68
      %p70 = scmp.eq.s32.totalorder %s30, 0
      %p71 = por %p69, %p70
      %s72 = ssub.s32 %s31, %s43
      %p73 = scmp.eq.s32.totalorder %s72, 0
      %s75 = sadd.s32 %s74, 1
      %s76 = scalar_select %p73, %s74, %s75
      %p79 = pneg %p73
      %p80 = scmp.eq.s32.totalorder %s24, 1
      %p81 = por %p79, %p80
      %p82 = scmp.ne.s32.totalorder %s74, %s77
      %p83 = scmp.eq.s32.totalorder %s24, 0
      %p84 = por %p82, %p83
      %p85 = scmp.ne.s32.totalorder %s74, %s77
      %p86 = scmp.eq.s32.totalorder %s29, 1
      %p87 = por %p85, %p86
      %p88 = scmp.ne.s32.totalorder %s77, %s78
      %p89 = scmp.eq.s32.totalorder %s29, 0
      %p90 = por %p88, %p89
      %p91 = scmp.ne.s32.totalorder %s77, %s78
      %p92 = scmp.eq.s32.totalorder %s30, 1
      %p93 = por %p91, %p92
      %p95 = scmp.ne.s32.totalorder %s78, %s94
      %p96 = scmp.eq.s32.totalorder %s30, 0
      %p97 = por %p95, %p96
      %s98 = ssub.s32 %s31, %s43
      %p99 = scmp.eq.s32.totalorder %s98, 0
      %s101 = sadd.s32 %s100, 1
      %s102 = scalar_select %p99, %s100, %s101
      %p105 = pneg %p99
      %p106 = scmp.eq.s32.totalorder %s24, 1
      %p107 = por %p105, %p106
      %p108 = scmp.ne.s32.totalorder %s100, %s103
      %p109 = scmp.eq.s32.totalorder %s24, 0
      %p110 = por %p108, %p109
      %p111 = scmp.ne.s32.totalorder %s100, %s103
      %p112 = scmp.eq.s32.totalorder %s29, 1
      %p113 = por %p111, %p112
      %p114 = scmp.ne.s32.totalorder %s103, %s104
      %p115 = scmp.eq.s32.totalorder %s29, 0
      %p116 = por %p114, %p115
      %p117 = scmp.ne.s32.totalorder %s103, %s104
      %p118 = scmp.eq.s32.totalorder %s30, 1
      %p119 = por %p117, %p118
      %p121 = scmp.ne.s32.totalorder %s104, %s120
      %p122 = scmp.eq.s32.totalorder %s30, 0
      %p123 = por %p121, %p122
      %s124 = ssub.s32 %s31, %s43
      %s125 = ssub.s32 %s32, %s39
      %s126 = sor.u32 %s124, %s125
      %p127 = scmp.eq.s32.totalorder %s126, 0
      %s129 = sadd.s32 %s128, 1
      %s130 = scalar_select %p127, %s128, %s129
      %p133 = pneg %p127
      %p134 = scmp.eq.s32.totalorder %s24, 1
      %p135 = por %p133, %p134
      %p136 = scmp.ne.s32.totalorder %s128, %s131
      %p137 = scmp.eq.s32.totalorder %s24, 0
      %p138 = por %p136, %p137
      %p139 = scmp.ne.s32.totalorder %s128, %s131
      %p140 = scmp.eq.s32.totalorder %s29, 1
      %p141 = por %p139, %p140
      %p142 = scmp.ne.s32.totalorder %s131, %s132
      %p143 = scmp.eq.s32.totalorder %s29, 0
      %p144 = por %p142, %p143
      %p145 = scmp.ne.s32.totalorder %s131, %s132
      %p146 = scmp.eq.s32.totalorder %s30, 1
      %p147 = por %p145, %p146
      %p149 = scmp.ne.s32.totalorder %s132, %s148
      %p150 = scmp.eq.s32.totalorder %s30, 0
      %p151 = por %p149, %p150
      %s152 = ssub.s32 %s31, %s43
      %s153 = ssub.s32 %s32, %s39
      %s154 = sor.u32 %s152, %s153
      %p155 = scmp.eq.s32.totalorder %s154, 0
      %s157 = sadd.s32 %s156, 1
      %s158 = scalar_select %p155, %s156, %s157
      %p161 = pneg %p155
      %p162 = scmp.eq.s32.totalorder %s24, 1
      %p163 = por %p161, %p162
      %p164 = scmp.ne.s32.totalorder %s156, %s159
      %p165 = scmp.eq.s32.totalorder %s24, 0
      %p166 = por %p164, %p165
      %p167 = scmp.ne.s32.totalorder %s156, %s159
      %p168 = scmp.eq.s32.totalorder %s29, 1
      %p169 = por %p167, %p168
      %p170 = scmp.ne.s32.totalorder %s159, %s160
      %p171 = scmp.eq.s32.totalorder %s29, 0
      %p172 = por %p170, %p171
      %p173 = scmp.ne.s32.totalorder %s159, %s160
      %p174 = scmp.eq.s32.totalorder %s30, 1
      %p175 = por %p173, %p174
      %p177 = scmp.ne.s32.totalorder %s160, %s176
      %p178 = scmp.eq.s32.totalorder %s30, 0
      %p179 = por %p177, %p178
      %s180 = ssub.s32 %s31, %s43
      %s181 = ssub.s32 %s32, %s39
      %s182 = sor.u32 %s180, %s181
      %p183 = scmp.eq.s32.totalorder %s182, 0
      %s185 = sadd.s32 %s184, 1
      %s186 = scalar_select %p183, %s184, %s185
      %p189 = pneg %p183
      %p190 = scmp.eq.s32.totalorder %s24, 1
      %p191 = por %p189, %p190
      %p192 = scmp.ne.s32.totalorder %s184, %s187
      %p193 = scmp.eq.s32.totalorder %s24, 0
      %p194 = por %p192, %p193
      %p195 = scmp.ne.s32.totalorder %s184, %s187
      %p196 = scmp.eq.s32.totalorder %s29, 1
      %p197 = por %p195, %p196
      %p198 = scmp.ne.s32.totalorder %s187, %s188
      %p199 = scmp.eq.s32.totalorder %s29, 0
      %p200 = por %p198, %p199
      %p201 = scmp.ne.s32.totalorder %s187, %s188
      %p202 = scmp.eq.s32.totalorder %s30, 1
      %p203 = por %p201, %p202
      %p205 = scmp.ne.s32.totalorder %s188, %s204
      %p206 = scmp.eq.s32.totalorder %s30, 0
      %p207 = por %p205, %p206
      %p208 = scmp.le.s32.totalorder 1, %s24
      %p209 = scmp.lt.s32.totalorder %s24, 3
      %p210 = pnand %p208, %p209
      %p211 = pneg %p210
      // Predicated region
      $region9: #{tpu_custom_call.1} parent=5 // pred_check
        _
      $region10: #{tpu_custom_call.1} parent=5 // pred_check_branch
        %213 = sbr.rel (%p210) target = $region12
      $region11: #{tpu_custom_call.1} parent=5 // pred_region
        %s214 = ssub.s32 %s24, 1
      $region12: #{tpu_custom_call.1} parent=5 // pred_fallthru
        _
      %p215 = scmp.lt.s32.totalorder %s24, 2
      // Predicated region
      $region13: #{tpu_custom_call.1} parent=5 // pred_check
        %p216 = pneg %p215
      $region14: #{tpu_custom_call.1} parent=5 // pred_check_branch
        %218 = sbr.rel (%p216) target = $region16
      $region15: #{tpu_custom_call.1} parent=5 // pred_region
        // Predicated region
        $region17: #{tpu_custom_call.1} parent=15 // pred_check
          %p219 = pneg %p58
        $region18: #{tpu_custom_call.1} parent=15 // pred_check_branch
          %221 = sbr.rel (%p219) target = $region20
        $region19: #{tpu_custom_call.1} parent=15 // pred_region
          %s222 = sand.u32 %s48, 1
          %s223 = scalar_lea.sflag [#allocation3], %s222
          %s224 = sand.u32 %s48, 1
          %s225 = smul.addr %s224, 16
          %s226 = scalar_lea.vmem [#allocation2], %s225
          %s227 = smul.u32 2, %s31
          %s229 = ssub.s32 256, 256
          %230 = vsyncadd %s223, %s229
          %s231 = sadd.s32 %s32, %s227
          %s232 = smul.addr %s231, 128
          %s233 = scalar_lea.hbm %s0, %s232
          %s234 = sshll.u32 %s226, 4
          %s235 = int_to_ptr.vmem [resolvable:$true] %s234
          %240 = dma.hbm_to_vmem [thread:$0]  %s233, 256, %s235, %s223, 128, 128, 8
        $region20: #{tpu_custom_call.1} parent=15 // pred_fallthru
          _
        // Predicated region
        $region21: #{tpu_custom_call.1} parent=15 // pred_check
          %p241 = pneg %p84
        $region22: #{tpu_custom_call.1} parent=15 // pred_check_branch
          %243 = sbr.rel (%p241) target = $region24
        $region23: #{tpu_custom_call.1} parent=15 // pred_region
          %s244 = sand.u32 %s24, 1
          %s245 = scalar_lea.sflag [#allocation6], %s244
          %s246 = sand.u32 %s74, 1
          %s247 = smul.addr %s246, 16
          %s248 = scalar_lea.vmem [#allocation5], %s247
          %s249 = smul.u32 2, %s31
          %s251 = ssub.s32 256, 256
          %252 = vsyncadd %s245, %s251
          %s253 = smul.addr %s249, 128
          %s254 = scalar_lea.hbm %s1, %s253
          %s255 = sshll.u32 %s248, 4
          %s256 = int_to_ptr.vmem [resolvable:$true] %s255
          %261 = dma.hbm_to_vmem [thread:$0]  %s254, 256, %s256, %s245, 128, 128, 8
        $region24: #{tpu_custom_call.1} parent=15 // pred_fallthru
          _
        // Predicated region
        $region25: #{tpu_custom_call.1} parent=15 // pred_check
          %p262 = pneg %p110
        $region26: #{tpu_custom_call.1} parent=15 // pred_check_branch
          %264 = sbr.rel (%p262) target = $region28
        $region27: #{tpu_custom_call.1} parent=15 // pred_region
          %s265 = sand.u32 %s24, 1
          %s266 = scalar_lea.sflag [#allocation6], %s265
          %s267 = sand.u32 %s100, 1
          %s268 = smul.addr %s267, 16
          %s269 = scalar_lea.vmem [#allocation7], %s268
          %s270 = smul.u32 2, %s31
          %s272 = ssub.s32 256, 256
          %273 = vsyncadd %s266, %s272
          %s274 = smul.addr %s270, 128
          %s275 = scalar_lea.hbm %s2, %s274
          %s276 = sshll.u32 %s269, 4
          %s277 = int_to_ptr.vmem [resolvable:$true] %s276
          %282 = dma.hbm_to_vmem [thread:$0]  %s275, 256, %s277, %s266, 128, 128, 8
        $region28: #{tpu_custom_call.1} parent=15 // pred_fallthru
          _
        // Predicated region
        $region29: #{tpu_custom_call.1} parent=15 // pred_check
          %p283 = pneg %p138
        $region30: #{tpu_custom_call.1} parent=15 // pred_check_branch
          %285 = sbr.rel (%p283) target = $region32
        $region31: #{tpu_custom_call.1} parent=15 // pred_region
          %s286 = smul.u32 2, %s31
          %p287 = scmp.lt.s32.totalorder %s286, 3
          %s288 = scalar_select %p287, %s286, 3
          %p289 = scmp.lt.s32.totalorder %s32, 0
          %s290 = scalar_select %p289, %s32, 0
          %s291 = sadd.s32 %s290, %s288
          %s292 = smul.addr %s291, 2
          %s293 = scalar_lea.vmem %s3, %s292
          %s294 = smul.u32 2, %s31
        $region32: #{tpu_custom_call.1} parent=15 // pred_fallthru
          _
      $region16: #{tpu_custom_call.1} parent=5 // pred_fallthru
        _
      %p295 = scmp.le.s32.totalorder 1, %s24
      %p296 = scmp.lt.s32.totalorder %s24, 3
      %p297 = pnand %p295, %p296
      %p298 = pneg %p297
      // Predicated region
      $region33: #{tpu_custom_call.1} parent=5 // pred_check
        _
      $region34: #{tpu_custom_call.1} parent=5 // pred_check_branch
        %300 = sbr.rel (%p297) target = $region36
      $region35: #{tpu_custom_call.1} parent=5 // pred_region
        %s301 = ssub.s32 %s24, 1
        %s302 = sand.u32 %s51, 1
        %s303 = scalar_lea.sflag [#allocation3], %s302
        %s304 = sand.u32 %s51, 1
        %s305 = smul.addr %s304, 16
        %s306 = scalar_lea.vmem [#allocation2], %s305
        // Predicated region
        $region37: #{tpu_custom_call.1} parent=35 // pred_check
          %p307 = pneg %p64
        $region38: #{tpu_custom_call.1} parent=35 // pred_check_branch
          %309 = sbr.rel (%p307) target = $region40
        $region39: #{tpu_custom_call.1} parent=35 // pred_region
          %310 = dma.done %s303, 256
        $region40: #{tpu_custom_call.1} parent=35 // pred_fallthru
          _
        %s311 = sand.u32 %s29, 1
        %s312 = scalar_lea.sflag [#allocation6], %s311
        %s313 = sand.u32 %s77, 1
        %s314 = smul.addr %s313, 16
        %s315 = scalar_lea.vmem [#allocation5], %s314
        // Predicated region
        $region41: #{tpu_custom_call.1} parent=35 // pred_check
          %p316 = pneg %p90
        $region42: #{tpu_custom_call.1} parent=35 // pred_check_branch
          %318 = sbr.rel (%p316) target = $region44
        $region43: #{tpu_custom_call.1} parent=35 // pred_region
          %319 = dma.done %s312, 256
        $region44: #{tpu_custom_call.1} parent=35 // pred_fallthru
          _
        %s320 = sand.u32 %s29, 1
        %s321 = scalar_lea.sflag [#allocation6], %s320
        %s322 = sand.u32 %s103, 1
        %s323 = smul.addr %s322, 16
        %s324 = scalar_lea.vmem [#allocation7], %s323
        // Predicated region
        $region45: #{tpu_custom_call.1} parent=35 // pred_check
          %p325 = pneg %p116
        $region46: #{tpu_custom_call.1} parent=35 // pred_check_branch
          %327 = sbr.rel (%p325) target = $region48
        $region47: #{tpu_custom_call.1} parent=35 // pred_region
          %328 = dma.done %s321, 256
        $region48: #{tpu_custom_call.1} parent=35 // pred_fallthru
          _
        %s329 = sand.u32 %s51, 1
        %s330 = scalar_lea.sflag [#allocation3], %s329
        %s331 = sand.u32 %s51, 1
        %s332 = smul.addr %s331, 16
        %s333 = scalar_lea.vmem [#allocation2], %s332
        %p334 = pneg %p64
        %p335 = pneg %p61
        %s336 = sand.u32 %s29, 1
        %s337 = scalar_lea.sflag [#allocation6], %s336
        %s338 = sand.u32 %s77, 1
        %s339 = smul.addr %s338, 16
        %s340 = scalar_lea.vmem [#allocation5], %s339
        %p341 = pneg %p90
        %p342 = pneg %p87
        %s343 = sand.u32 %s29, 1
        %s344 = scalar_lea.sflag [#allocation6], %s343
        %s345 = sand.u32 %s103, 1
        %s346 = smul.addr %s345, 16
        %s347 = scalar_lea.vmem [#allocation7], %s346
        %p348 = pneg %p116
        %p349 = pneg %p113
        %s350 = smul.u32 2, %s33
        %p351 = scmp.lt.s32.totalorder %s350, 3
        %s352 = scalar_select %p351, %s350, 3
        %p353 = scmp.lt.s32.totalorder %s34, 0
        %s354 = scalar_select %p353, %s34, 0
        %s355 = sadd.s32 %s354, %s352
        %s356 = smul.addr %s355, 2
        %s357 = scalar_lea.vmem %s3, %s356
        %p358 = pneg %p144
        %p359 = pneg %p141
        %p360 = pneg %p172
        %p361 = pneg %p169
        %s362 = sand.u32 %s159, 1
        %s363 = scalar_lea.sflag [#allocation4], %s362
        %s364 = sand.u32 %s159, 1
        %s365 = smul.addr %s364, 16
        %s366 = scalar_lea.vmem [#allocation8], %s365
        %p367 = pneg %p200
        %p368 = pneg %p197
        %s369 = sand.u32 %s187, 1
        %s370 = scalar_lea.sflag [#allocation10], %s369
        %s371 = sand.u32 %s187, 1
        %s372 = smul.addr %s371, 16
        %s373 = scalar_lea.vmem [#allocation9], %s372
        %s374 = smul.u32 2, %s33
        %s375 = smul.u32 2, %s33
        %s376 = smul.u32 2, %s33
        %s377 = smul.u32 2, %s33
        %p378 = scmp.lt.s32.totalorder %s377, 3
        %s379 = scalar_select %p378, %s377, 3
        %p380 = scmp.lt.s32.totalorder %s34, 0
        %s381 = scalar_select %p380, %s34, 0
        %s382 = sadd.s32 %s381, %s379
        %s383 = smul.addr %s382, 2
        %s384 = scalar_lea.vmem %s3, %s383
        %s385 = smul.u32 2, %s33
        %s386 = smul.u32 2, %s33
        %s387 = smul.u32 2, %s33
        %v390 = vld [vmem:[%s306] sm:$0xff]
        %v391 = vld [vmem:[%s306 + $0x8] sm:$0xff]
        %v392 = vld [vmem:[%s315] sm:$0xff]
        %v393 = vld [vmem:[%s315 + $0x8] sm:$0xff]
        %v394 = vld [vmem:[%s324] sm:$0xff]
        %v395 = vld [vmem:[%s324 + $0x8] sm:$0xff]
        %v396 = vld [vmem:[%s384] sm:$0x3]
        %v397 = vld [vmem:[%s384 + $0x2] sm:$0x3]
        %vm398 = vnez %v396
        %vm399 = vnez %v397
        %vm400 = vcmask 130048
        %v402 = vsel %vm400, %v390, 0
        %v405 = vsel %vm400, %v392, 0
        %407 = vmatprep.subr.mxu0 0.0
        %408 = vmatpush1.xpose.msra.mxu0 %v405
        %409 = vmatprep.subr.mxu0 0.0
        %410 = vmatpush1.xpose.msra.mxu0 0.0
        %411 = vmatprep.subr.mxu0 0.0
        %412 = vmatpush1.xpose.msra.mxu0 0.0
        %413 = vmatprep.subr.mxu0 0.0
        %414 = vmatpush1.xpose.msra.mxu0 0.0
        %415 = vmatprep.subr.mxu0 0.0
        %416 = vmatpush1.xpose.msra.mxu0 0.0
        %417 = vmatprep.subr.mxu0 0.0
        %418 = vmatpush1.xpose.msra.mxu0 0.0
        %419 = vmatprep.subr.mxu0 0.0
        %420 = vmatpush1.xpose.msra.mxu0 0.0
        %421 = vmatprep.subr.mxu0 0.0
        %422 = vmatpush1.xpose.msra.mxu0 0.0
        %423 = vmatprep.subr.mxu0 0.0
        %424 = vmatpush1.xpose.msra.mxu0 0.0
        %425 = vmatprep.subr.mxu0 0.0
        %426 = vmatpush1.xpose.msra.mxu0 0.0
        %427 = vmatprep.subr.mxu0 0.0
        %428 = vmatpush1.xpose.msra.mxu0 0.0
        %429 = vmatprep.subr.mxu0 0.0
        %430 = vmatpush1.xpose.msra.mxu0 0.0
        %431 = vmatprep.subr.mxu0 0.0
        %432 = vmatpush1.xpose.msra.mxu0 0.0
        %433 = vmatprep.subr.mxu0 0.0
        %434 = vmatpush1.xpose.msra.mxu0 0.0
        %435 = vmatprep.subr.mxu0 0.0
        %436 = vmatpush1.xpose.msra.mxu0 0.0
        %437 = vmatprep.subr.mxu0 0.0
        %438 = vmatpush1.xpose.msra.mxu0 0.0
        %439 = vmatprep.subr.mxu0 0.0
        %440 = vmatpush1.xpose.msra.mxu0 0.0
        %441 = vmatprep.subr.mxu0 0.0
        %442 = vmatpush1.xpose.msra.mxu0 0.0
        %443 = vmatprep.subr.mxu0 0.0
        %444 = vmatpush1.xpose.msra.mxu0 0.0
        %445 = vmatprep.subr.mxu0 0.0
        %446 = vmatpush1.xpose.msra.mxu0 0.0
        %447 = vmatprep.subr.mxu0 0.0
        %448 = vmatpush1.xpose.msra.mxu0 0.0
        %449 = vmatprep.subr.mxu0 0.0
        %450 = vmatpush1.xpose.msra.mxu0 0.0
        %451 = vmatprep.subr.mxu0 0.0
        %452 = vmatpush1.xpose.msra.mxu0 0.0
        %453 = vmatprep.subr.mxu0 0.0
        %454 = vmatpush1.xpose.msra.mxu0 0.0
        %455 = vmatprep.subr.mxu0 0.0
        %456 = vmatpush1.xpose.msra.mxu0 0.0
        %457 = vmatprep.subr.mxu0 0.0
        %458 = vmatpush1.xpose.msra.mxu0 0.0
        %459 = vmatprep.subr.mxu0 0.0
        %460 = vmatpush1.xpose.msra.mxu0 0.0
        %461 = vmatprep.subr.mxu0 0.0
        %462 = vmatpush1.xpose.msra.mxu0 0.0
        %463 = vmatprep.subr.mxu0 0.0
        %464 = vmatpush1.xpose.msra.mxu0 0.0
        %465 = vmatprep.subr.mxu0 0.0
        %466 = vmatpush1.xpose.msra.mxu0 0.0
        %467 = vmatprep.subr.mxu0 0.0
        %468 = vmatpush1.xpose.msra.mxu0 0.0
        %469 = vmatprep.subr.mxu0 0.0
        %470 = vmatpush1.xpose.msra.mxu0 0.0
        %471 = vmatprep.mubr.f32.mxu0 0.0
        %472 = vmatmul.mubr.f32.gmra.mrb[0].mxu0 %v402
        %v473 = vpop.f32.mrb[0].mxu0
        %v474 = vadd.f32 0.0, %v473
        %v475 = vpop.f32.mrb[0].mxu0
        %476 = vdwg.mxu0
        %v478 = vsel %vm400, %v391, 0
        %v481 = vsel %vm400, %v393, 0
        %483 = vmatprep.subr.mxu0 0.0
        %484 = vmatpush1.xpose.msra.mxu0 %v481
        %485 = vmatprep.subr.mxu0 0.0
        %486 = vmatpush1.xpose.msra.mxu0 0.0
        %487 = vmatprep.subr.mxu0 0.0
        %488 = vmatpush1.xpose.msra.mxu0 0.0
        %489 = vmatprep.subr.mxu0 0.0
        %490 = vmatpush1.xpose.msra.mxu0 0.0
        %491 = vmatprep.subr.mxu0 0.0
        %492 = vmatpush1.xpose.msra.mxu0 0.0
        %493 = vmatprep.subr.mxu0 0.0
        %494 = vmatpush1.xpose.msra.mxu0 0.0
        %495 = vmatprep.subr.mxu0 0.0
        %496 = vmatpush1.xpose.msra.mxu0 0.0
        %497 = vmatprep.subr.mxu0 0.0
        %498 = vmatpush1.xpose.msra.mxu0 0.0
        %499 = vmatprep.subr.mxu0 0.0
        %500 = vmatpush1.xpose.msra.mxu0 0.0
        %501 = vmatprep.subr.mxu0 0.0
        %502 = vmatpush1.xpose.msra.mxu0 0.0
        %503 = vmatprep.subr.mxu0 0.0
        %504 = vmatpush1.xpose.msra.mxu0 0.0
        %505 = vmatprep.subr.mxu0 0.0
        %506 = vmatpush1.xpose.msra.mxu0 0.0
        %507 = vmatprep.subr.mxu0 0.0
        %508 = vmatpush1.xpose.msra.mxu0 0.0
        %509 = vmatprep.subr.mxu0 0.0
        %510 = vmatpush1.xpose.msra.mxu0 0.0
        %511 = vmatprep.subr.mxu0 0.0
        %512 = vmatpush1.xpose.msra.mxu0 0.0
        %513 = vmatprep.subr.mxu0 0.0
        %514 = vmatpush1.xpose.msra.mxu0 0.0
        %515 = vmatprep.subr.mxu0 0.0
        %516 = vmatpush1.xpose.msra.mxu0 0.0
        %517 = vmatprep.subr.mxu0 0.0
        %518 = vmatpush1.xpose.msra.mxu0 0.0
        %519 = vmatprep.subr.mxu0 0.0
        %520 = vmatpush1.xpose.msra.mxu0 0.0
        %521 = vmatprep.subr.mxu0 0.0
        %522 = vmatpush1.xpose.msra.mxu0 0.0
        %523 = vmatprep.subr.mxu0 0.0
        %524 = vmatpush1.xpose.msra.mxu0 0.0
        %525 = vmatprep.subr.mxu0 0.0
        %526 = vmatpush1.xpose.msra.mxu0 0.0
        %527 = vmatprep.subr.mxu0 0.0
        %528 = vmatpush1.xpose.msra.mxu0 0.0
        %529 = vmatprep.subr.mxu0 0.0
        %530 = vmatpush1.xpose.msra.mxu0 0.0
        %531 = vmatprep.subr.mxu0 0.0
        %532 = vmatpush1.xpose.msra.mxu0 0.0
        %533 = vmatprep.subr.mxu0 0.0
        %534 = vmatpush1.xpose.msra.mxu0 0.0
        %535 = vmatprep.subr.mxu0 0.0
        %536 = vmatpush1.xpose.msra.mxu0 0.0
        %537 = vmatprep.subr.mxu0 0.0
        %538 = vmatpush1.xpose.msra.mxu0 0.0
        %539 = vmatprep.subr.mxu0 0.0
        %540 = vmatpush1.xpose.msra.mxu0 0.0
        %541 = vmatprep.subr.mxu0 0.0
        %542 = vmatpush1.xpose.msra.mxu0 0.0
        %543 = vmatprep.subr.mxu0 0.0
        %544 = vmatpush1.xpose.msra.mxu0 0.0
        %545 = vmatprep.subr.mxu0 0.0
        %546 = vmatpush1.xpose.msra.mxu0 0.0
        %547 = vmatprep.mubr.f32.mxu0 0.0
        %548 = vmatmul.mubr.f32.gmra.mrb[0].mxu0 %v478
        %v549 = vpop.f32.mrb[0].mxu0
        %v550 = vadd.f32 0.0, %v549
        %v551 = vpop.f32.mrb[0].mxu0
        %552 = vdwg.mxu0
        %v553 = vmul.f32 %v474, 0.25
        %v554 = vmul.f32 %v550, 0.25
        %v555 = vsel %vm398, 16843009, 0
        %v556 = vsel %vm399, 16843009, 0
        %v557 = vunpack.c.0.s8 %v555
        %v558 = vunpack.c.0.s8 %v556
        %vm559 = vcmp.ne.s32.totalorder %v557, 0
        %vm560 = vcmp.ne.s32.totalorder %v558, 0
        %v561 = vsel %vm559, -1e+09, %v553
        %v562 = vsel %vm560, -1e+09, %v554
        %vm563 = vcmask 64512
        %v564 = vsel %vm563, %v561, -inf
        %565 = vmax.xlane.f32.xlu0 %v564
        %v566 = vpop.xlane.xlu0 %565
        %v567 = vsel %vm563, %v562, -inf
        %568 = vmax.xlane.f32.xlu0 %v567
        %v569 = vpop.xlane.xlu0 %568
        %v570 = vsub.f32 %v561, %v566
        %v571 = vsub.f32 %v562, %v569
        %v572 = vmul.f32 %v570, 1.442695
        %v573 = vpow.pop %v572
        %v574 = vmul.f32 %v571, 1.442695
        %v575 = vpow.pop %v574
        %v576 = vsel %vm563, %v573, 0.0
        %577 = vadd.xlane.f32.xlu0 %v576
        %v578 = vpop.xlane.xlu0 %577
        %v579 = vsel %vm563, %v575, 0.0
        %580 = vadd.xlane.f32.xlu0 %v579
        %v581 = vpop.xlane.xlu0 %580
        %v582 = vrcp.pop %v578
        %v583 = vrcp.pop %v581
        %v584 = vmul.f32 %v573, %v582
        %v585 = vmul.f32 %v575, %v583
        %v587 = vsel %vm563, %v584, 0
        %589 = vmatprep.subr.mxu0 0.0
        %590 = vmatpush1.msra.mxu0 %v394
        %591 = vmatprep.subr.mxu0 0.0
        %592 = vmatpush1.msra.mxu0 0.0
        %593 = vmatprep.subr.mxu0 0.0
        %594 = vmatpush1.msra.mxu0 0.0
        %595 = vmatprep.subr.mxu0 0.0
        %596 = vmatpush1.msra.mxu0 0.0
        %597 = vmatprep.subr.mxu0 0.0
        %598 = vmatpush1.msra.mxu0 0.0
        %599 = vmatprep.subr.mxu0 0.0
        %600 = vmatpush1.msra.mxu0 0.0
        %601 = vmatprep.subr.mxu0 0.0
        %602 = vmatpush1.msra.mxu0 0.0
        %603 = vmatprep.subr.mxu0 0.0
        %604 = vmatpush1.msra.mxu0 0.0
        %605 = vmatprep.subr.mxu0 0.0
        %606 = vmatpush1.msra.mxu0 0.0
        %607 = vmatprep.subr.mxu0 0.0
        %608 = vmatpush1.msra.mxu0 0.0
        %609 = vmatprep.subr.mxu0 0.0
        %610 = vmatpush1.msra.mxu0 0.0
        %611 = vmatprep.subr.mxu0 0.0
        %612 = vmatpush1.msra.mxu0 0.0
        %613 = vmatprep.subr.mxu0 0.0
        %614 = vmatpush1.msra.mxu0 0.0
        %615 = vmatprep.subr.mxu0 0.0
        %616 = vmatpush1.msra.mxu0 0.0
        %617 = vmatprep.subr.mxu0 0.0
        %618 = vmatpush1.msra.mxu0 0.0
        %619 = vmatprep.subr.mxu0 0.0
        %620 = vmatpush1.msra.mxu0 0.0
        %621 = vmatprep.subr.mxu0 0.0
        %622 = vmatpush1.msra.mxu0 0.0
        %623 = vmatprep.subr.mxu0 0.0
        %624 = vmatpush1.msra.mxu0 0.0
        %625 = vmatprep.subr.mxu0 0.0
        %626 = vmatpush1.msra.mxu0 0.0
        %627 = vmatprep.subr.mxu0 0.0
        %628 = vmatpush1.msra.mxu0 0.0
        %629 = vmatprep.subr.mxu0 0.0
        %630 = vmatpush1.msra.mxu0 0.0
        %631 = vmatprep.subr.mxu0 0.0
        %632 = vmatpush1.msra.mxu0 0.0
        %633 = vmatprep.subr.mxu0 0.0
        %634 = vmatpush1.msra.mxu0 0.0
        %635 = vmatprep.subr.mxu0 0.0
        %636 = vmatpush1.msra.mxu0 0.0
        %637 = vmatprep.subr.mxu0 0.0
        %638 = vmatpush1.msra.mxu0 0.0
        %639 = vmatprep.subr.mxu0 0.0
        %640 = vmatpush1.msra.mxu0 0.0
        %641 = vmatprep.subr.mxu0 0.0
        %642 = vmatpush1.msra.mxu0 0.0
        %643 = vmatprep.subr.mxu0 0.0
        %644 = vmatpush1.msra.mxu0 0.0
        %645 = vmatprep.subr.mxu0 0.0
        %646 = vmatpush1.msra.mxu0 0.0
        %647 = vmatprep.subr.mxu0 0.0
        %648 = vmatpush1.msra.mxu0 0.0
        %649 = vmatprep.subr.mxu0 0.0
        %650 = vmatpush1.msra.mxu0 0.0
        %651 = vmatprep.subr.mxu0 0.0
        %652 = vmatpush1.msra.mxu0 0.0
        %653 = vmatprep.mubr.f32.mxu0 0.0
        %654 = vmatmul.mubr.f32.gmra.mrb[0].mxu0 %v587
        %v655 = vpop.f32.mrb[0].mxu0
        %v656 = vadd.f32 0.0, %v655
        %v657 = vpop.f32.mrb[0].mxu0
        %658 = vdwg.mxu0
        %v660 = vsel %vm563, %v585, 0
        %662 = vmatprep.subr.mxu0 0.0
        %663 = vmatpush1.msra.mxu0 %v395
        %664 = vmatprep.subr.mxu0 0.0
        %665 = vmatpush1.msra.mxu0 0.0
        %666 = vmatprep.subr.mxu0 0.0
        %667 = vmatpush1.msra.mxu0 0.0
        %668 = vmatprep.subr.mxu0 0.0
        %669 = vmatpush1.msra.mxu0 0.0
        %670 = vmatprep.subr.mxu0 0.0
        %671 = vmatpush1.msra.mxu0 0.0
        %672 = vmatprep.subr.mxu0 0.0
        %673 = vmatpush1.msra.mxu0 0.0
        %674 = vmatprep.subr.mxu0 0.0
        %675 = vmatpush1.msra.mxu0 0.0
        %676 = vmatprep.subr.mxu0 0.0
        %677 = vmatpush1.msra.mxu0 0.0
        %678 = vmatprep.subr.mxu0 0.0
        %679 = vmatpush1.msra.mxu0 0.0
        %680 = vmatprep.subr.mxu0 0.0
        %681 = vmatpush1.msra.mxu0 0.0
        %682 = vmatprep.subr.mxu0 0.0
        %683 = vmatpush1.msra.mxu0 0.0
        %684 = vmatprep.subr.mxu0 0.0
        %685 = vmatpush1.msra.mxu0 0.0
        %686 = vmatprep.subr.mxu0 0.0
        %687 = vmatpush1.msra.mxu0 0.0
        %688 = vmatprep.subr.mxu0 0.0
        %689 = vmatpush1.msra.mxu0 0.0
        %690 = vmatprep.subr.mxu0 0.0
        %691 = vmatpush1.msra.mxu0 0.0
        %692 = vmatprep.subr.mxu0 0.0
        %693 = vmatpush1.msra.mxu0 0.0
        %694 = vmatprep.subr.mxu0 0.0
        %695 = vmatpush1.msra.mxu0 0.0
        %696 = vmatprep.subr.mxu0 0.0
        %697 = vmatpush1.msra.mxu0 0.0
        %698 = vmatprep.subr.mxu0 0.0
        %699 = vmatpush1.msra.mxu0 0.0
        %700 = vmatprep.subr.mxu0 0.0
        %701 = vmatpush1.msra.mxu0 0.0
        %702 = vmatprep.subr.mxu0 0.0
        %703 = vmatpush1.msra.mxu0 0.0
        %704 = vmatprep.subr.mxu0 0.0
        %705 = vmatpush1.msra.mxu0 0.0
        %706 = vmatprep.subr.mxu0 0.0
        %707 = vmatpush1.msra.mxu0 0.0
        %708 = vmatprep.subr.mxu0 0.0
        %709 = vmatpush1.msra.mxu0 0.0
        %710 = vmatprep.subr.mxu0 0.0
        %711 = vmatpush1.msra.mxu0 0.0
        %712 = vmatprep.subr.mxu0 0.0
        %713 = vmatpush1.msra.mxu0 0.0
        %714 = vmatprep.subr.mxu0 0.0
        %715 = vmatpush1.msra.mxu0 0.0
        %716 = vmatprep.subr.mxu0 0.0
        %717 = vmatpush1.msra.mxu0 0.0
        %718 = vmatprep.subr.mxu0 0.0
        %719 = vmatpush1.msra.mxu0 0.0
        %720 = vmatprep.subr.mxu0 0.0
        %721 = vmatpush1.msra.mxu0 0.0
        %722 = vmatprep.subr.mxu0 0.0
        %723 = vmatpush1.msra.mxu0 0.0
        %724 = vmatprep.subr.mxu0 0.0
        %725 = vmatpush1.msra.mxu0 0.0
        %726 = vmatprep.mubr.f32.mxu0 0.0
        %727 = vmatmul.mubr.f32.gmra.mrb[0].mxu0 %v660
        %v728 = vpop.f32.mrb[0].mxu0
        %v729 = vadd.f32 0.0, %v728
        %v730 = vpop.f32.mrb[0].mxu0
        %731 = vdwg.mxu0
        %732 = vst.msk [vmem:[%s366] sm:$0xff] %vm400, %v656
        %733 = vst.msk [vmem:[%s366 + $0x8] sm:$0xff] %vm400, %v729
        %734 = vst.msk [vmem:[%s373] sm:$0xff] %vm563, %v584
        %735 = vst.msk [vmem:[%s373 + $0x8] sm:$0xff] %vm563, %v585
        %s736 = sand.u32 %s159, 1
        %s737 = scalar_lea.sflag [#allocation4], %s736
        %s738 = sand.u32 %s159, 1
        %s739 = smul.addr %s738, 16
        %s740 = scalar_lea.vmem [#allocation8], %s739
        %s741 = sand.u32 %s187, 1
        %s742 = scalar_lea.sflag [#allocation10], %s741
        %s743 = sand.u32 %s187, 1
        %s744 = smul.addr %s743, 16
        %s745 = scalar_lea.vmem [#allocation9], %s744
        // Predicated region
        $region49: #{tpu_custom_call.1} parent=35 // pred_check
          %p746 = pneg %p169
        $region50: #{tpu_custom_call.1} parent=35 // pred_check_branch
          %748 = sbr.rel (%p746) target = $region52
        $region51: #{tpu_custom_call.1} parent=35 // pred_region
          %s749 = smul.u32 2, %s33
          %s751 = ssub.s32 256, 256
          %752 = vsyncadd %s737, %s751
          %s753 = sadd.s32 %s34, %s749
          %s754 = smul.addr %s753, 128
          %s755 = scalar_lea.hbm %s4, %s754
          %s756 = sshll.u32 %s740, 4
          %s757 = int_to_ptr.vmem [resolvable:$true] %s756
          %762 = dma.vmem_to_hbm [thread:$0]  %s757, 256, %s755, %s737, 128, 128, 8
        $region52: #{tpu_custom_call.1} parent=35 // pred_fallthru
          _
        // Predicated region
        $region53: #{tpu_custom_call.1} parent=35 // pred_check
          %p763 = pneg %p197
        $region54: #{tpu_custom_call.1} parent=35 // pred_check_branch
          %765 = sbr.rel (%p763) target = $region56
        $region55: #{tpu_custom_call.1} parent=35 // pred_region
          %s766 = smul.u32 2, %s33
          %s768 = ssub.s32 256, 256
          %769 = vsyncadd %s742, %s768
          %s770 = sadd.s32 %s34, %s766
          %s771 = smul.addr %s770, 128
          %s772 = scalar_lea.hbm %s5, %s771
          %s773 = sshll.u32 %s745, 4
          %s774 = int_to_ptr.vmem [resolvable:$true] %s773
          %779 = dma.vmem_to_hbm [thread:$0]  %s774, 256, %s772, %s742, 128, 128, 8
        $region56: #{tpu_custom_call.1} parent=35 // pred_fallthru
          _
      $region36: #{tpu_custom_call.1} parent=5 // pred_fallthru
        _
      %p780 = scmp.le.s32.totalorder 2, %s24
      // Predicated region
      $region57: #{tpu_custom_call.1} parent=5 // pred_check
        %p781 = pneg %p780
      $region58: #{tpu_custom_call.1} parent=5 // pred_check_branch
        %783 = sbr.rel (%p781) target = $region60
      $region59: #{tpu_custom_call.1} parent=5 // pred_region
        %s784 = ssub.s32 %s24, 2
        // Predicated region
        $region61: #{tpu_custom_call.1} parent=59 // pred_check
          %p785 = pneg %p175
        $region62: #{tpu_custom_call.1} parent=59 // pred_check_branch
          %787 = sbr.rel (%p785) target = $region64
        $region63: #{tpu_custom_call.1} parent=59 // pred_region
          %s788 = sand.u32 %s160, 1
          %s789 = scalar_lea.sflag [#allocation4], %s788
          %s790 = sand.u32 %s160, 1
          %s791 = smul.addr %s790, 16
          %s792 = scalar_lea.vmem [#allocation8], %s791
          %793 = dma.done %s789, 256
        $region64: #{tpu_custom_call.1} parent=59 // pred_fallthru
          _
        // Predicated region
        $region65: #{tpu_custom_call.1} parent=59 // pred_check
          %p794 = pneg %p203
        $region66: #{tpu_custom_call.1} parent=59 // pred_check_branch
          %796 = sbr.rel (%p794) target = $region68
        $region67: #{tpu_custom_call.1} parent=59 // pred_region
          %s797 = sand.u32 %s188, 1
          %s798 = scalar_lea.sflag [#allocation10], %s797
          %s799 = sand.u32 %s188, 1
          %s800 = smul.addr %s799, 16
          %s801 = scalar_lea.vmem [#allocation9], %s800
          %802 = dma.done %s798, 256
        $region68: #{tpu_custom_call.1} parent=59 // pred_fallthru
          _
      $region60: #{tpu_custom_call.1} parent=5 // pred_fallthru
        _
    $region6: #{tpu_custom_call.1} parent=1 // loop_footer
      %s28 = sadd.s32 1, %s24
    $region7: #{tpu_custom_call.1} parent=1 // loop_footer_branch
      %23 = sbr.rel target = $region3
    $region8: #{tpu_custom_call.1} parent=1 // loop_exit
      _
    %803 = vsyncpa [#allocation3], 1
    %s804 = scalar_lea.sflag [#allocation3], 1
    %805 = vsyncpa %s804, 1
    %806 = vsyncpa [#allocation6], 1
    %s807 = scalar_lea.sflag [#allocation6], 1
    %808 = vsyncpa %s807, 1
    %809 = vsyncpa [#allocation4], 1
    %s810 = scalar_lea.sflag [#allocation4], 1
    %811 = vsyncpa %s810, 1
    %812 = vsyncpa [#allocation10], 1
    %s813 = scalar_lea.sflag [#allocation10], 1
    %814 = vsyncpa %s813, 1

</llo_original>
